<compile_context>
chip_gen: v7x
topology: tpu7x:2x2x1
jax: 0.10.0
libtpu: 0.0.40
codegen_flags: <defaults>
</compile_context>

<pallas_src>
import functools
import math

import jax
import jax.numpy as jnp
from jax.experimental import pallas as pl
from jax.experimental.pallas import tpu as pltpu


def _round_up(v, m):
    return ((v + m - 1) // m) * m


def _prep(arr, padded_shape, compute_dtype):
    """Zero-pad + cast an operand for streaming.

    Fast path: an already tile-aligned array is passed through untouched (no
    extra HBM round trip); the kernel casts each tile on the fly instead.
    """
    if arr.shape == padded_shape:
        return arr
    out = jnp.zeros(padded_shape, compute_dtype)
    return out.at[tuple(slice(0, s) for s in arr.shape)].set(
        arr.astype(compute_dtype))


def _gcn_matmul_kernel(*refs, tk, compute_dtype, add_bias, resident_b):
    """acc += A_tile @ B_ktile; on the last k step: out = acc (+ bias)."""
    if add_bias:
        a_ref, b_ref, bias_ref, o_ref, acc_ref = refs
    else:
        a_ref, b_ref, o_ref, acc_ref = refs
        bias_ref = None

    kk = pl.program_id(1)

    @pl.when(kk == 0)
    def _():
        acc_ref[...] = jnp.zeros_like(acc_ref)

    # Per-tile cast (no-op if already compute_dtype); hidden under DMA slack.
    a = a_ref[...].astype(compute_dtype)
    if resident_b:
        k0 = pl.multiple_of(kk * tk, tk)       # slice the VMEM-resident RHS
        b = b_ref[pl.ds(k0, tk), :].astype(compute_dtype)
    else:
        b = b_ref[...].astype(compute_dtype)

    acc_ref[...] += jnp.dot(a, b, preferred_element_type=jnp.float32)

    @pl.when(kk == pl.num_programs(1) - 1)
    def _():
        res = acc_ref[...]
        if add_bias:
            res = res + bias_ref[...]
        o_ref[...] = res.astype(o_ref.dtype)


def _tiled_matmul(a, b, bias, *, tm, tk, out_dtype, compute_dtype, resident_b):
    """C = A @ B (+ bias).  Grid = (M/tm, K/tk); the full output width is a
    single lane-dense tile, so A is streamed from HBM exactly once."""
    m, k = a.shape
    k2, n = b.shape
    assert k == k2 and m % tm == 0 and k % tk == 0

    add_bias = bias is not None

    if resident_b:
        b_spec = pl.BlockSpec((k, n), lambda i, kk: (0, 0))    # fetched once
    else:
        b_spec = pl.BlockSpec((tk, n), lambda i, kk: (kk, 0))

    in_specs = [pl.BlockSpec((tm, tk), lambda i, kk: (i, kk)), b_spec]
    args = [a, b]
    if add_bias:
        in_specs.append(pl.BlockSpec((1, n), lambda i, kk: (0, 0)))
        args.append(bias)

    kernel = functools.partial(
        _gcn_matmul_kernel, tk=tk, compute_dtype=compute_dtype,
        add_bias=add_bias, resident_b=resident_b)

    out_isz = jnp.dtype(out_dtype).itemsize
    cost = pl.CostEstimate(
        flops=2 * m * n * k,
        transcendentals=0,
        bytes_accessed=(a.size * a.dtype.itemsize
                        + b.size * b.dtype.itemsize
                        + (bias.size * bias.dtype.itemsize if add_bias else 0)
                        + m * n * out_isz),
    )

    # VMEM budget from the actual buffers (double-buffered A/out tiles,
    # resident RHS, f32 accumulator), capped below v7x's 64 MiB physical VMEM.
    a_tile = tm * tk * a.dtype.itemsize
    b_buf = (k if resident_b else tk) * n * b.dtype.itemsize
    out_tile = tm * n * out_isz
    acc_bytes = tm * n * 4
    bias_bytes = n * 4 if add_bias else 0
    need = 2 * a_tile + 2 * b_buf + 2 * out_tile + acc_bytes + 2 * bias_bytes
    vmem_limit = int(min(max(need + (8 << 20), 32 << 20), 60 << 20))

    # TODO(synk): sweep pipeline_mode=pl.Buffered(3) on the streamed A
    # (adjacency) BlockSpec; modest DMA-latency win on the HBM-bound matmul.
    return pl.pallas_call(
        kernel,
        out_shape=jax.ShapeDtypeStruct((m, n), out_dtype),
        grid_spec=pltpu.PrefetchScalarGridSpec(
            num_scalar_prefetch=0,
            grid=(m // tm, k // tk),
            in_specs=in_specs,
            out_specs=pl.BlockSpec((tm, n), lambda i, kk: (i, 0)),
            scratch_shapes=[pltpu.VMEM((tm, n), jnp.float32)],
        ),
        compiler_params=pltpu.CompilerParams(
            dimension_semantics=("parallel", "arbitrary"),
            vmem_limit_bytes=vmem_limit,
        ),
        cost_estimate=cost,
    )(*args)


@functools.partial(jax.jit, static_argnames=("compute_dtype",))
def graph_convolution(x, adj, weight, bias=None, *, compute_dtype=jnp.bfloat16):
    """Pallas GCN layer: adj @ (x @ weight) + bias."""
    n, in_features = x.shape
    out_features = weight.shape[1]

    out_pad = _round_up(out_features, 128)

    # Node-dimension tiling (rows of x/adj, contraction dim of the adj matmul).
    n128 = _round_up(n, 128)
    if n128 <= 1024:
        n_pad = n128
        tm2 = tk2 = n128
    else:
        n_pad = _round_up(n, 1024)
        tk2 = 512
        tm2 = 1024 if out_pad <= 512 else 512   # keep out tile + acc in budget
    tm1 = n_pad if n_pad <= 1024 else tm2

    # in_features tiling (contraction of the first matmul).
    in128 = _round_up(in_features, 128)
    if in128 <= 512:
        in_pad = in128
        tk1 = in128
    else:
        in_pad = _round_up(in_features, 512)
        tk1 = 512

    # Pad/cast only when required; aligned operands (notably the big adj) are
    # passed through and cast per-tile inside the kernel.
    x_p = _prep(x, (n_pad, in_pad), compute_dtype)
    w_p = _prep(weight, (in_pad, out_pad), compute_dtype)
    adj_p = _prep(adj, (n_pad, n_pad), compute_dtype)
    bias_p = None
    if bias is not None:
        bias_p = jnp.zeros((1, out_pad), jnp.float32)
        bias_p = bias_p.at[0, :out_features].set(bias.astype(jnp.float32))

    budget = 32 * 1024 * 1024   # resident-RHS budget (incl. double buffering)

    # support = x @ W : W is tiny -> keep it fully VMEM-resident.
    w_resident = 2 * w_p.size * w_p.dtype.itemsize <= budget
    support = _tiled_matmul(
        x_p, w_p, None, tm=tm1, tk=tk1,
        out_dtype=compute_dtype, compute_dtype=compute_dtype,
        resident_b=w_resident)

    # output = adj @ support + bias : `support` stays VMEM-resident across the
    # whole row loop when it fits, so the (N, N) adjacency is the only operand
    # streamed from HBM, exactly once.
    s_resident = 2 * support.size * support.dtype.itemsize <= budget
    out_p = _tiled_matmul(
        adj_p, support, bias_p, tm=tm2, tk=tk2,
        out_dtype=jnp.float32, compute_dtype=compute_dtype,
        resident_b=s_resident)

    # TODO(synk): for genuinely sparse adjacencies, switch to a block-sparse
    # formulation (PrefetchScalarGridSpec with per-row-tile nonzero block ids)
    # and optionally int8/fp8-quantize adj with a per-row scale folded into the
    # final k step for another ~2x cut of the dominant HBM stream.

    if n_pad == n and out_pad == out_features:
        return out_p
    return out_p[:n, :out_features]


if __name__ == "__main__":
    key = jax.random.PRNGKey(0)
    k_x, k_adj, k_w = jax.random.split(key, 3)

    # Small, module-consistent shapes: N nodes, in_features -> out_features.
    N = 8
    in_features = 32
    out_features = 16

    x = jax.random.normal(k_x, (N, in_features), dtype=jnp.float32)

    # Row-normalized dense adjacency (self-loops added), sparse in spirit.
    adj_raw = (jax.random.uniform(k_adj, (N, N)) > 0.6).astype(jnp.float32)
    adj = adj_raw + jnp.eye(N, dtype=jnp.float32)
    adj = adj / jnp.sum(adj, axis=1, keepdims=True)

    # Deterministic params mirroring nn.init.xavier_normal_ and zero bias.
    xavier_std = math.sqrt(2.0 / (in_features + out_features))
    weight = xavier_std * jax.random.normal(
        k_w, (in_features, out_features), dtype=jnp.float32)
    bias = jnp.zeros((out_features,), dtype=jnp.float32)

    # High-precision reference.
    ref = jnp.dot(adj, jnp.dot(x, weight, precision="highest"),
                  precision="highest") + bias

    # Default bf16-streaming path (f32 accumulation).
    out = jax.block_until_ready(graph_convolution(x, adj, weight, bias))
    assert out.shape == (N, out_features)
    assert jnp.allclose(out, ref, atol=5e-2, rtol=5e-2), (
        float(jnp.max(jnp.abs(out - ref))))

    # f32 escape hatch for strict comparisons against the PyTorch f32 layer.
    out_f32 = jax.block_until_ready(
        graph_convolution(x, adj, weight, bias, compute_dtype=jnp.float32))
    assert jnp.allclose(out_f32, ref, atol=2e-2, rtol=2e-2), (
        float(jnp.max(jnp.abs(out_f32 - ref))))

    print("KERNEL_OK")
</pallas_src>

<mosaic_0001>
module attributes {stable_mosaic.version = 11 : i64} {
  func.func @_gcn_matmul_kernel(%arg0: i32, %arg1: i32, %arg2: memref<128x128xbf16, #tpu.memory_space<vmem>>, %arg3: memref<128x128xbf16, #tpu.memory_space<vmem>>, %arg4: memref<1x128xf32, #tpu.memory_space<vmem>>, %arg5: memref<128x128xf32, #tpu.memory_space<vmem>>, %arg6: memref<128x128xf32, #tpu.memory_space<vmem>>) attributes {dimension_semantics = [#tpu.dimension_semantics<parallel>, #tpu.dimension_semantics<arbitrary>], iteration_bounds = array<i64: 1, 1>, scalar_prefetch = 0 : i64, scratch_operands = 1 : i64, tpu.core_type = #tpu.core_type<tc>, window_params = [{transform_indices = @transform_0, window_bounds = array<i64: 128, 128>}, {pipeline_mode = #tpu.pipeline_mode<synchronous>, transform_indices = @transform_1, window_bounds = array<i64: 128, 128>}, {pipeline_mode = #tpu.pipeline_mode<synchronous>, transform_indices = @transform_2, window_bounds = array<i64: 1, 128>}, {transform_indices = @transform_3, window_bounds = array<i64: 128, 128>}]} {
    %c0_i32 = arith.constant 0 : i32
    %0 = arith.cmpi eq, %arg1, %c0_i32 : i32
    %1 = arith.extui %0 : i1 to i32
    %c0_i32_0 = arith.constant 0 : i32
    %2 = arith.cmpi ne, %1, %c0_i32_0 : i32
    scf.if %2 {
      %cst_9 = arith.constant 0.000000e+00 : f32
      %15 = vector.broadcast %cst_9 : f32 to vector<128x128xf32>
      %c0_10 = arith.constant 0 : index
      %c0_11 = arith.constant 0 : index
      %16 = vector.load %arg6[%c0_10, %c0_11] : memref<128x128xf32, #tpu.memory_space<vmem>>, vector<128x128xf32>
      tpu.vector_store %arg6[%c0_10, %c0_11], %15 {strides = array<i32>} : memref<128x128xf32, #tpu.memory_space<vmem>>, vector<128x128xf32>,
    } else {
    }
    %c0 = arith.constant 0 : index
    %c0_1 = arith.constant 0 : index
    %3 = vector.load %arg2[%c0, %c0_1] : memref<128x128xbf16, #tpu.memory_space<vmem>>, vector<128x128xbf16>
    %c128_i32 = arith.constant 128 : i32
    %4 = arith.muli %arg1, %c128_i32 : i32
    %5 = tpu.assume_multiple %4, 128 : i32
    %6 = arith.index_cast %5 : i32 to index
    %c0_2 = arith.constant 0 : index
    %7 = vector.load %arg3[%6, %c0_2] : memref<128x128xbf16, #tpu.memory_space<vmem>>, vector<128x128xbf16>
    %c0_3 = arith.constant 0 : index
    %c0_4 = arith.constant 0 : index
    %8 = vector.load %arg6[%c0_3, %c0_4] : memref<128x128xf32, #tpu.memory_space<vmem>>, vector<128x128xf32>
    %cst = arith.constant dense<0.000000e+00> : vector<128x128xf32>
    %9 = tpu.matmul %3, %7, %cst {dimension_numbers = #tpu.dot_dimension_numbers<[1], [0], [0], [1], [0, 0, 1, 1], [], []>} : vector<128x128xbf16>, vector<128x128xbf16>, vector<128x128xf32> -> vector<128x128xf32>
    %10 = arith.addf %8, %9 : vector<128x128xf32>
    %c0_5 = arith.constant 0 : index
    %c0_6 = arith.constant 0 : index
    %11 = vector.load %arg6[%c0_5, %c0_6] : memref<128x128xf32, #tpu.memory_space<vmem>>, vector<128x128xf32>
    tpu.vector_store %arg6[%c0_5, %c0_6], %10 {strides = array<i32>} : memref<128x128xf32, #tpu.memory_space<vmem>>, vector<128x128xf32>,
    %c0_i32_7 = arith.constant 0 : i32
    %12 = arith.cmpi eq, %arg1, %c0_i32_7 : i32
    %13 = arith.extui %12 : i1 to i32
    %c0_i32_8 = arith.constant 0 : i32
    %14 = arith.cmpi ne, %13, %c0_i32_8 : i32
    scf.if %14 {
      %c0_9 = arith.constant 0 : index
      %c0_10 = arith.constant 0 : index
      %15 = vector.load %arg6[%c0_9, %c0_10] : memref<128x128xf32, #tpu.memory_space<vmem>>, vector<128x128xf32>
      %c0_11 = arith.constant 0 : index
      %c0_12 = arith.constant 0 : index
      %16 = vector.load %arg4[%c0_11, %c0_12] : memref<1x128xf32, #tpu.memory_space<vmem>>, vector<1x128xf32>
      %17 = vector.broadcast %16 : vector<1x128xf32> to vector<128x128xf32>
      %18 = arith.addf %15, %17 : vector<128x128xf32>
      %c0_13 = arith.constant 0 : index
      %c0_14 = arith.constant 0 : index
      %19 = vector.load %arg5[%c0_13, %c0_14] : memref<128x128xf32, #tpu.memory_space<vmem>>, vector<128x128xf32>
      tpu.vector_store %arg5[%c0_13, %c0_14], %18 {strides = array<i32>} : memref<128x128xf32, #tpu.memory_space<vmem>>, vector<128x128xf32>,
    } else {
    }
    return
  }
  func.func @transform_0(%arg0: i32, %arg1: i32) -> (i32, i32) {
    %c0_i32 = arith.constant 0 : i32
    return %arg0, %arg1 : i32, i32
  }
  func.func @transform_1(%arg0: i32, %arg1: i32) -> (i32, i32) {
    %c0_i32 = arith.constant 0 : i32
    %c0_i32_0 = arith.constant 0 : i32
    %c0_i32_1 = arith.constant 0 : i32
    return %c0_i32, %c0_i32_0 : i32, i32
  }
  func.func @transform_2(%arg0: i32, %arg1: i32) -> (i32, i32) {
    %c0_i32 = arith.constant 0 : i32
    %c0_i32_0 = arith.constant 0 : i32
    %c0_i32_1 = arith.constant 0 : i32
    return %c0_i32, %c0_i32_0 : i32, i32
  }
  func.func @transform_3(%arg0: i32, %arg1: i32) -> (i32, i32) {
    %c0_i32 = arith.constant 0 : i32
    %c0_i32_0 = arith.constant 0 : i32
    return %arg0, %c0_i32 : i32, i32
  }
}

module attributes {stable_mosaic.version = 11 : i64} {
  func.func @_gcn_matmul_kernel(%arg0: i32, %arg1: i32, %arg2: memref<128x128xbf16, #tpu.memory_space<vmem>>, %arg3: memref<128x128xbf16, #tpu.memory_space<vmem>>, %arg4: memref<128x128xbf16, #tpu.memory_space<vmem>>, %arg5: memref<128x128xf32, #tpu.memory_space<vmem>>) attributes {dimension_semantics = [#tpu.dimension_semantics<parallel>, #tpu.dimension_semantics<arbitrary>], iteration_bounds = array<i64: 1, 1>, scalar_prefetch = 0 : i64, scratch_operands = 1 : i64, tpu.core_type = #tpu.core_type<tc>, window_params = [{transform_indices = @transform_0, window_bounds = array<i64: 128, 128>}, {pipeline_mode = #tpu.pipeline_mode<synchronous>, transform_indices = @transform_1, window_bounds = array<i64: 128, 128>}, {transform_indices = @transform_2, window_bounds = array<i64: 128, 128>}]} {
    %c0_i32 = arith.constant 0 : i32
    %0 = arith.cmpi eq, %arg1, %c0_i32 : i32
    %1 = arith.extui %0 : i1 to i32
    %c0_i32_0 = arith.constant 0 : i32
    %2 = arith.cmpi ne, %1, %c0_i32_0 : i32
    scf.if %2 {
      %cst_9 = arith.constant 0.000000e+00 : f32
      %15 = vector.broadcast %cst_9 : f32 to vector<128x128xf32>
      %c0_10 = arith.constant 0 : index
      %c0_11 = arith.constant 0 : index
      %16 = vector.load %arg5[%c0_10, %c0_11] : memref<128x128xf32, #tpu.memory_space<vmem>>, vector<128x128xf32>
      tpu.vector_store %arg5[%c0_10, %c0_11], %15 {strides = array<i32>} : memref<128x128xf32, #tpu.memory_space<vmem>>, vector<128x128xf32>,
    } else {
    }
    %c0 = arith.constant 0 : index
    %c0_1 = arith.constant 0 : index
    %3 = vector.load %arg2[%c0, %c0_1] : memref<128x128xbf16, #tpu.memory_space<vmem>>, vector<128x128xbf16>
    %c128_i32 = arith.constant 128 : i32
    %4 = arith.muli %arg1, %c128_i32 : i32
    %5 = tpu.assume_multiple %4, 128 : i32
    %6 = arith.index_cast %5 : i32 to index
    %c0_2 = arith.constant 0 : index
    %7 = vector.load %arg3[%6, %c0_2] : memref<128x128xbf16, #tpu.memory_space<vmem>>, vector<128x128xbf16>
    %c0_3 = arith.constant 0 : index
    %c0_4 = arith.constant 0 : index
    %8 = vector.load %arg5[%c0_3, %c0_4] : memref<128x128xf32, #tpu.memory_space<vmem>>, vector<128x128xf32>
    %cst = arith.constant dense<0.000000e+00> : vector<128x128xf32>
    %9 = tpu.matmul %3, %7, %cst {dimension_numbers = #tpu.dot_dimension_numbers<[1], [0], [0], [1], [0, 0, 1, 1], [], []>} : vector<128x128xbf16>, vector<128x128xbf16>, vector<128x128xf32> -> vector<128x128xf32>
    %10 = arith.addf %8, %9 : vector<128x128xf32>
    %c0_5 = arith.constant 0 : index
    %c0_6 = arith.constant 0 : index
    %11 = vector.load %arg5[%c0_5, %c0_6] : memref<128x128xf32, #tpu.memory_space<vmem>>, vector<128x128xf32>
    tpu.vector_store %arg5[%c0_5, %c0_6], %10 {strides = array<i32>} : memref<128x128xf32, #tpu.memory_space<vmem>>, vector<128x128xf32>,
    %c0_i32_7 = arith.constant 0 : i32
    %12 = arith.cmpi eq, %arg1, %c0_i32_7 : i32
    %13 = arith.extui %12 : i1 to i32
    %c0_i32_8 = arith.constant 0 : i32
    %14 = arith.cmpi ne, %13, %c0_i32_8 : i32
    scf.if %14 {
      %c0_9 = arith.constant 0 : index
      %c0_10 = arith.constant 0 : index
      %15 = vector.load %arg5[%c0_9, %c0_10] : memref<128x128xf32, #tpu.memory_space<vmem>>, vector<128x128xf32>
      %16 = arith.truncf %15 : vector<128x128xf32> to vector<128x128xbf16>
      %c0_11 = arith.constant 0 : index
      %c0_12 = arith.constant 0 : index
      %17 = vector.load %arg4[%c0_11, %c0_12] : memref<128x128xbf16, #tpu.memory_space<vmem>>, vector<128x128xbf16>
      tpu.vector_store %arg4[%c0_11, %c0_12], %16 {strides = array<i32>} : memref<128x128xbf16, #tpu.memory_space<vmem>>, vector<128x128xbf16>,
    } else {
    }
    return
  }
  func.func @transform_0(%arg0: i32, %arg1: i32) -> (i32, i32) {
    %c0_i32 = arith.constant 0 : i32
    return %arg0, %arg1 : i32, i32
  }
  func.func @transform_1(%arg0: i32, %arg1: i32) -> (i32, i32) {
    %c0_i32 = arith.constant 0 : i32
    %c0_i32_0 = arith.constant 0 : i32
    %c0_i32_1 = arith.constant 0 : i32
    return %c0_i32, %c0_i32_0 : i32, i32
  }
  func.func @transform_2(%arg0: i32, %arg1: i32) -> (i32, i32) {
    %c0_i32 = arith.constant 0 : i32
    %c0_i32_0 = arith.constant 0 : i32
    return %arg0, %c0_i32 : i32, i32
  }
}

</mosaic_0001>

<llo_original>
// kernel: graph_convolution.3
$region0: #{graph_convolution.3}
  #allocation0 [shape = 'u32[]', space=smem, size = 0x4, offset = 0x4, fixed_abs, tag = 'smem constant byte address 0x4 - core index']
  #allocation1 [shape = 'u32[144,128]{1,0:T(1,128)}', space=vmem, size = 0x12000, scoped, tag = 'internal scratch']
  #allocation2 [shape = 'f32[128,128]{1,0:T(8,128)}', space=vmem, size = 0x10000, scoped, tag = 'scratch operand']
  %s0 = inlined_call_operand.vmem [shape: bf16[128,128], index: 0, kind: input, shape index: {}]
  %s1 = inlined_call_operand.vmem [shape: bf16[128,128], index: 1, kind: input, shape index: {}]
  %s2 = inlined_call_operand.vmem [shape: f32[1,128], index: 2, kind: input, shape index: {}]
  %s3 = inlined_call_operand.vmem [shape: f32[128,128], index: 3, kind: output, shape index: {}]
  %s4 = sld [smem:[#allocation0]]
  $region30: #{graph_convolution.3} parent=0
    _
  %s6 = ssub.s32 1, %s4
  %s7 = scalar_select 0, %s6, %s4
  // Predicated region
  $region2: #{graph_convolution.3} parent=0 // pred_check
    _
  $region3: #{graph_convolution.3} parent=0 // pred_check_branch
    %9 = sbr.rel (0) target = $region5
  $region4: #{graph_convolution.3} parent=0 // pred_region
    _
  $region5: #{graph_convolution.3} parent=0 // pred_fallthru
    _
  // Predicated region
  $region6: #{graph_convolution.3} parent=0 // pred_check
    _
  $region7: #{graph_convolution.3} parent=0 // pred_check_branch
    %11 = sbr.rel (0) target = $region9
  $region8: #{graph_convolution.3} parent=0 // pred_region
    _
  $region9: #{graph_convolution.3} parent=0 // pred_fallthru
    _
  // Predicated region
  $region10: #{graph_convolution.3} parent=0 // pred_check
    _
  $region11: #{graph_convolution.3} parent=0 // pred_check_branch
    %13 = sbr.rel (0) target = $region13
  $region12: #{graph_convolution.3} parent=0 // pred_region
    _
  $region13: #{graph_convolution.3} parent=0 // pred_fallthru
    _
  %p15 = scmp.eq.s32.totalorder 0, 0
  // Predicated region
  $region14: #{graph_convolution.3} parent=0 // pred_check
    %p16 = pneg %p15
  $region15: #{graph_convolution.3} parent=0 // pred_check_branch
    %18 = sbr.rel (%p16) target = $region17
  $region16: #{graph_convolution.3} parent=0 // pred_region
    %19 = vst [vmem:[#allocation2] sm:$0xff] 0.0
    %20 = vst [vmem:[#allocation2 + $0x8] sm:$0xff] 0.0
    %21 = vst [vmem:[#allocation2 + $0x10] sm:$0xff] 0.0
    %22 = vst [vmem:[#allocation2 + $0x18] sm:$0xff] 0.0
    %23 = vst [vmem:[#allocation2 + $0x20] sm:$0xff] 0.0
    %24 = vst [vmem:[#allocation2 + $0x28] sm:$0xff] 0.0
    %25 = vst [vmem:[#allocation2 + $0x30] sm:$0xff] 0.0
    %26 = vst [vmem:[#allocation2 + $0x38] sm:$0xff] 0.0
    %27 = vst [vmem:[#allocation2 + $0x40] sm:$0xff] 0.0
    %28 = vst [vmem:[#allocation2 + $0x48] sm:$0xff] 0.0
    %29 = vst [vmem:[#allocation2 + $0x50] sm:$0xff] 0.0
    %30 = vst [vmem:[#allocation2 + $0x58] sm:$0xff] 0.0
    %31 = vst [vmem:[#allocation2 + $0x60] sm:$0xff] 0.0
    %32 = vst [vmem:[#allocation2 + $0x68] sm:$0xff] 0.0
    %33 = vst [vmem:[#allocation2 + $0x70] sm:$0xff] 0.0
    %34 = vst [vmem:[#allocation2 + $0x78] sm:$0xff] 0.0
  $region17: #{graph_convolution.3} parent=0 // pred_fallthru
    _
  %v35 = vld [vmem:[%s0] sm:$0xf]
  %v36 = vld [vmem:[%s0 + $0x4] sm:$0xf]
  %v37 = vld [vmem:[%s0 + $0x8] sm:$0xf]
  %v38 = vld [vmem:[%s0 + $0xc] sm:$0xf]
  %v39 = vld [vmem:[%s0 + $0x10] sm:$0xf]
  %v40 = vld [vmem:[%s0 + $0x14] sm:$0xf]
  %v41 = vld [vmem:[%s0 + $0x18] sm:$0xf]
  %v42 = vld [vmem:[%s0 + $0x1c] sm:$0xf]
  %v43 = vld [vmem:[%s0 + $0x20] sm:$0xf]
  %v44 = vld [vmem:[%s0 + $0x24] sm:$0xf]
  %v45 = vld [vmem:[%s0 + $0x28] sm:$0xf]
  %v46 = vld [vmem:[%s0 + $0x2c] sm:$0xf]
  %v47 = vld [vmem:[%s0 + $0x30] sm:$0xf]
  %v48 = vld [vmem:[%s0 + $0x34] sm:$0xf]
  %v49 = vld [vmem:[%s0 + $0x38] sm:$0xf]
  %v50 = vld [vmem:[%s0 + $0x3c] sm:$0xf]
  %s51 = smul.u32 0, 128
  %s52 = sshra.s32 %s51, 3
  %s53 = sand.u32 %s51, 7
  %s54 = smul.addr %s52, 4
  %s55 = scalar_lea.vmem %s1, %s54
  %v56 = vld [vmem:[%s55] sm:$0xf]
  %v57 = vld [vmem:[%s55 + $0x4] sm:$0xf]
  %v58 = vld [vmem:[%s55 + $0x8] sm:$0xf]
  %v59 = vld [vmem:[%s55 + $0xc] sm:$0xf]
  %v60 = vld [vmem:[%s55 + $0x10] sm:$0xf]
  %v61 = vld [vmem:[%s55 + $0x14] sm:$0xf]
  %v62 = vld [vmem:[%s55 + $0x18] sm:$0xf]
  %v63 = vld [vmem:[%s55 + $0x1c] sm:$0xf]
  %v64 = vld [vmem:[%s55 + $0x20] sm:$0xf]
  %v65 = vld [vmem:[%s55 + $0x24] sm:$0xf]
  %v66 = vld [vmem:[%s55 + $0x28] sm:$0xf]
  %v67 = vld [vmem:[%s55 + $0x2c] sm:$0xf]
  %v68 = vld [vmem:[%s55 + $0x30] sm:$0xf]
  %v69 = vld [vmem:[%s55 + $0x34] sm:$0xf]
  %v70 = vld [vmem:[%s55 + $0x38] sm:$0xf]
  %v71 = vld [vmem:[%s55 + $0x3c] sm:$0xf]
  %v72 = vld [vmem:[#allocation2] sm:$0xff]
  %v73 = vld [vmem:[#allocation2 + $0x8] sm:$0xff]
  %v74 = vld [vmem:[#allocation2 + $0x10] sm:$0xff]
  %v75 = vld [vmem:[#allocation2 + $0x18] sm:$0xff]
  %v76 = vld [vmem:[#allocation2 + $0x20] sm:$0xff]
  %v77 = vld [vmem:[#allocation2 + $0x28] sm:$0xff]
  %v78 = vld [vmem:[#allocation2 + $0x30] sm:$0xff]
  %v79 = vld [vmem:[#allocation2 + $0x38] sm:$0xff]
  %v80 = vld [vmem:[#allocation2 + $0x40] sm:$0xff]
  %v81 = vld [vmem:[#allocation2 + $0x48] sm:$0xff]
  %v82 = vld [vmem:[#allocation2 + $0x50] sm:$0xff]
  %v83 = vld [vmem:[#allocation2 + $0x58] sm:$0xff]
  %v84 = vld [vmem:[#allocation2 + $0x60] sm:$0xff]
  %v85 = vld [vmem:[#allocation2 + $0x68] sm:$0xff]
  %v86 = vld [vmem:[#allocation2 + $0x70] sm:$0xff]
  %v87 = vld [vmem:[#allocation2 + $0x78] sm:$0xff]
  %v104 = vunpack.c.l.b16 %v35
  %v105 = vunpack.c.l.b16 %v36
  %v106 = vunpack.c.l.b16 %v37
  %v107 = vunpack.c.l.b16 %v38
  %v108 = vunpack.c.l.b16 %v39
  %v109 = vunpack.c.l.b16 %v40
  %v110 = vunpack.c.l.b16 %v41
  %v111 = vunpack.c.l.b16 %v42
  %v112 = vunpack.c.l.b16 %v43
  %v113 = vunpack.c.l.b16 %v44
  %v114 = vunpack.c.l.b16 %v45
  %v115 = vunpack.c.l.b16 %v46
  %v116 = vunpack.c.l.b16 %v47
  %v117 = vunpack.c.l.b16 %v48
  %v118 = vunpack.c.l.b16 %v49
  %v119 = vunpack.c.l.b16 %v50
  %v120 = vpack.c.b16 %v105, %v104
  %v121 = vpack.c.b16 %v107, %v106
  %v122 = vpack.c.b16 %v109, %v108
  %v123 = vpack.c.b16 %v111, %v110
  %v124 = vpack.c.b16 %v113, %v112
  %v125 = vpack.c.b16 %v115, %v114
  %v126 = vpack.c.b16 %v117, %v116
  %v127 = vpack.c.b16 %v119, %v118
  %v152 = vunpack.c.l.b16 %v56
  %v153 = vunpack.c.l.b16 %v57
  %v154 = vunpack.c.l.b16 %v58
  %v155 = vunpack.c.l.b16 %v59
  %v156 = vunpack.c.l.b16 %v60
  %v157 = vunpack.c.l.b16 %v61
  %v158 = vunpack.c.l.b16 %v62
  %v159 = vunpack.c.l.b16 %v63
  %v160 = vunpack.c.l.b16 %v64
  %v161 = vunpack.c.l.b16 %v65
  %v162 = vunpack.c.l.b16 %v66
  %v163 = vunpack.c.l.b16 %v67
  %v164 = vunpack.c.l.b16 %v68
  %v165 = vunpack.c.l.b16 %v69
  %v166 = vunpack.c.l.b16 %v70
  %v167 = vunpack.c.l.b16 %v71
  %v168 = vpack.c.b16 %v153, %v152
  %v169 = vpack.c.b16 %v155, %v154
  %v170 = vpack.c.b16 %v157, %v156
  %v171 = vpack.c.b16 %v159, %v158
  %v172 = vpack.c.b16 %v161, %v160
  %v173 = vpack.c.b16 %v163, %v162
  %v174 = vpack.c.b16 %v165, %v164
  %v175 = vpack.c.b16 %v167, %v166
  %184 = vmatprep.subr.bf16.mxu0 0
  %185 = vmatpush1.bf16.msra.mxu0 %v168
  %186 = vmatprep.subr.bf16.mxu0 0
  %187 = vmatpush1.bf16.msra.mxu0 %v169
  %188 = vmatprep.subr.bf16.mxu0 0
  %189 = vmatpush1.bf16.msra.mxu0 %v170
  %190 = vmatprep.subr.bf16.mxu0 0
  %191 = vmatpush1.bf16.msra.mxu0 %v171
  %192 = vmatprep.subr.bf16.mxu0 0
  %193 = vmatpush1.bf16.msra.mxu0 %v172
  %194 = vmatprep.subr.bf16.mxu0 0
  %195 = vmatpush1.bf16.msra.mxu0 %v173
  %196 = vmatprep.subr.bf16.mxu0 0
  %197 = vmatpush1.bf16.msra.mxu0 %v174
  %198 = vmatprep.subr.bf16.mxu0 0
  %199 = vmatpush1.bf16.msra.mxu0 %v175
  %200 = vmatprep.subr.bf16.mxu0 0
  %201 = vmatpush1.bf16.msra.mxu0 0
  %202 = vmatprep.subr.bf16.mxu0 0
  %203 = vmatpush1.bf16.msra.mxu0 0
  %204 = vmatprep.subr.bf16.mxu0 0
  %205 = vmatpush1.bf16.msra.mxu0 0
  %206 = vmatprep.subr.bf16.mxu0 0
  %207 = vmatpush1.bf16.msra.mxu0 0
  %208 = vmatprep.subr.bf16.mxu0 0
  %209 = vmatpush1.bf16.msra.mxu0 0
  %210 = vmatprep.subr.bf16.mxu0 0
  %211 = vmatpush1.bf16.msra.mxu0 0
  %212 = vmatprep.subr.bf16.mxu0 0
  %213 = vmatpush1.bf16.msra.mxu0 0
  %214 = vmatprep.subr.bf16.mxu0 0
  %215 = vmatpush1.bf16.msra.mxu0 0
  %216 = vmatprep.mubr.bf16.mxu0 0
  %217 = vmatmul.mubr.bf16.gmra.mrb[0].mxu0 %v120
  %v218 = vpop.f32.mrb[0].mxu0
  %v219 = vadd.f32 0.0, %v218
  %v220 = vpop.f32.mrb[0].mxu0
  %v221 = vpop.f32.mrb[0].mxu0
  %v222 = vadd.f32 0.0, %v221
  %v223 = vpop.f32.mrb[0].mxu0
  %224 = vmatprep.mubr.bf16.mxu0 0
  %225 = vmatmul.mubr.bf16.gmra.mrb[0].mxu0 %v121
  %v226 = vpop.f32.mrb[0].mxu0
  %v227 = vadd.f32 0.0, %v226
  %v228 = vpop.f32.mrb[0].mxu0
  %v229 = vpop.f32.mrb[0].mxu0
  %v230 = vadd.f32 0.0, %v229
  %v231 = vpop.f32.mrb[0].mxu0
  %232 = vmatprep.mubr.bf16.mxu0 0
  %233 = vmatmul.mubr.bf16.gmra.mrb[0].mxu0 %v122
  %v234 = vpop.f32.mrb[0].mxu0
  %v235 = vadd.f32 0.0, %v234
  %v236 = vpop.f32.mrb[0].mxu0
  %v237 = vpop.f32.mrb[0].mxu0
  %v238 = vadd.f32 0.0, %v237
  %v239 = vpop.f32.mrb[0].mxu0
  %240 = vmatprep.mubr.bf16.mxu0 0
  %241 = vmatmul.mubr.bf16.gmra.mrb[0].mxu0 %v123
  %v242 = vpop.f32.mrb[0].mxu0
  %v243 = vadd.f32 0.0, %v242
  %v244 = vpop.f32.mrb[0].mxu0
  %v245 = vpop.f32.mrb[0].mxu0
  %v246 = vadd.f32 0.0, %v245
  %v247 = vpop.f32.mrb[0].mxu0
  %248 = vmatprep.mubr.bf16.mxu0 0
  %249 = vmatmul.mubr.bf16.gmra.mrb[0].mxu0 %v124
  %v250 = vpop.f32.mrb[0].mxu0
  %v251 = vadd.f32 0.0, %v250
  %v252 = vpop.f32.mrb[0].mxu0
  %v253 = vpop.f32.mrb[0].mxu0
  %v254 = vadd.f32 0.0, %v253
  %v255 = vpop.f32.mrb[0].mxu0
  %256 = vmatprep.mubr.bf16.mxu0 0
  %257 = vmatmul.mubr.bf16.gmra.mrb[0].mxu0 %v125
  %v258 = vpop.f32.mrb[0].mxu0
  %v259 = vadd.f32 0.0, %v258
  %v260 = vpop.f32.mrb[0].mxu0
  %v261 = vpop.f32.mrb[0].mxu0
  %v262 = vadd.f32 0.0, %v261
  %v263 = vpop.f32.mrb[0].mxu0
  %264 = vmatprep.mubr.bf16.mxu0 0
  %265 = vmatmul.mubr.bf16.gmra.mrb[0].mxu0 %v126
  %v266 = vpop.f32.mrb[0].mxu0
  %v267 = vadd.f32 0.0, %v266
  %v268 = vpop.f32.mrb[0].mxu0
  %v269 = vpop.f32.mrb[0].mxu0
  %v270 = vadd.f32 0.0, %v269
  %v271 = vpop.f32.mrb[0].mxu0
  %272 = vmatprep.mubr.bf16.mxu0 0
  %273 = vmatmul.mubr.bf16.gmra.mrb[0].mxu0 %v127
  %v274 = vpop.f32.mrb[0].mxu0
  %v275 = vadd.f32 0.0, %v274
  %v276 = vpop.f32.mrb[0].mxu0
  %v277 = vpop.f32.mrb[0].mxu0
  %v278 = vadd.f32 0.0, %v277
  %v279 = vpop.f32.mrb[0].mxu0
  %280 = vdwg.mxu0
  %v281 = vadd.f32 %v72, %v219
  %v282 = vadd.f32 %v73, %v222
  %v283 = vadd.f32 %v74, %v227
  %v284 = vadd.f32 %v75, %v230
  %v285 = vadd.f32 %v76, %v235
  %v286 = vadd.f32 %v77, %v238
  %v287 = vadd.f32 %v78, %v243
  %v288 = vadd.f32 %v79, %v246
  %v289 = vadd.f32 %v80, %v251
  %v290 = vadd.f32 %v81, %v254
  %v291 = vadd.f32 %v82, %v259
  %v292 = vadd.f32 %v83, %v262
  %v293 = vadd.f32 %v84, %v267
  %v294 = vadd.f32 %v85, %v270
  %v295 = vadd.f32 %v86, %v275
  %v296 = vadd.f32 %v87, %v278
  %297 = vst [vmem:[#allocation2] sm:$0xff] %v281
  %298 = vst [vmem:[#allocation2 + $0x8] sm:$0xff] %v282
  %299 = vst [vmem:[#allocation2 + $0x10] sm:$0xff] %v283
  %300 = vst [vmem:[#allocation2 + $0x18] sm:$0xff] %v284
  %301 = vst [vmem:[#allocation2 + $0x20] sm:$0xff] %v285
  %302 = vst [vmem:[#allocation2 + $0x28] sm:$0xff] %v286
  %303 = vst [vmem:[#allocation2 + $0x30] sm:$0xff] %v287
  %304 = vst [vmem:[#allocation2 + $0x38] sm:$0xff] %v288
  %305 = vst [vmem:[#allocation2 + $0x40] sm:$0xff] %v289
  %306 = vst [vmem:[#allocation2 + $0x48] sm:$0xff] %v290
  %307 = vst [vmem:[#allocation2 + $0x50] sm:$0xff] %v291
  %308 = vst [vmem:[#allocation2 + $0x58] sm:$0xff] %v292
  %309 = vst [vmem:[#allocation2 + $0x60] sm:$0xff] %v293
  %310 = vst [vmem:[#allocation2 + $0x68] sm:$0xff] %v294
  %311 = vst [vmem:[#allocation2 + $0x70] sm:$0xff] %v295
  %312 = vst [vmem:[#allocation2 + $0x78] sm:$0xff] %v296
  // Predicated region
  $region18: #{graph_convolution.3} parent=0 // pred_check
    %p313 = pneg %p15
  $region19: #{graph_convolution.3} parent=0 // pred_check_branch
    %315 = sbr.rel (%p313) target = $region21
  $region20: #{graph_convolution.3} parent=0 // pred_region
    %v316 = vld [vmem:[#allocation2] sm:$0xff]
    %v317 = vld [vmem:[#allocation2 + $0x8] sm:$0xff]
    %v318 = vld [vmem:[#allocation2 + $0x10] sm:$0xff]
    %v319 = vld [vmem:[#allocation2 + $0x18] sm:$0xff]
    %v320 = vld [vmem:[#allocation2 + $0x20] sm:$0xff]
    %v321 = vld [vmem:[#allocation2 + $0x28] sm:$0xff]
    %v322 = vld [vmem:[#allocation2 + $0x30] sm:$0xff]
    %v323 = vld [vmem:[#allocation2 + $0x38] sm:$0xff]
    %v324 = vld [vmem:[#allocation2 + $0x40] sm:$0xff]
    %v325 = vld [vmem:[#allocation2 + $0x48] sm:$0xff]
    %v326 = vld [vmem:[#allocation2 + $0x50] sm:$0xff]
    %v327 = vld [vmem:[#allocation2 + $0x58] sm:$0xff]
    %v328 = vld [vmem:[#allocation2 + $0x60] sm:$0xff]
    %v329 = vld [vmem:[#allocation2 + $0x68] sm:$0xff]
    %v330 = vld [vmem:[#allocation2 + $0x70] sm:$0xff]
    %v331 = vld [vmem:[#allocation2 + $0x78] sm:$0xff]
    %v332 = vld [vmem:[%s2] sm:$0x1]
    %v334 = vlaneseq
    %v335 = vshrl.u32 %v334, 7
    %v336 = vsub.s32 0, %v335
    %v337 = vrot.slane %v332, %v336
    %v339 = vadd.f32 %v316, %v337
    %v340 = vadd.f32 %v317, %v337
    %v341 = vadd.f32 %v318, %v337
    %v342 = vadd.f32 %v319, %v337
    %v343 = vadd.f32 %v320, %v337
    %v344 = vadd.f32 %v321, %v337
    %v345 = vadd.f32 %v322, %v337
    %v346 = vadd.f32 %v323, %v337
    %v347 = vadd.f32 %v324, %v337
    %v348 = vadd.f32 %v325, %v337
    %v349 = vadd.f32 %v326, %v337
    %v350 = vadd.f32 %v327, %v337
    %v351 = vadd.f32 %v328, %v337
    %v352 = vadd.f32 %v329, %v337
    %v353 = vadd.f32 %v330, %v337
    %v354 = vadd.f32 %v331, %v337
    %355 = vst [vmem:[%s3] sm:$0xff] %v339
    %356 = vst [vmem:[%s3 + $0x8] sm:$0xff] %v340
    %357 = vst [vmem:[%s3 + $0x10] sm:$0xff] %v341
    %358 = vst [vmem:[%s3 + $0x18] sm:$0xff] %v342
    %359 = vst [vmem:[%s3 + $0x20] sm:$0xff] %v343
    %360 = vst [vmem:[%s3 + $0x28] sm:$0xff] %v344
    %361 = vst [vmem:[%s3 + $0x30] sm:$0xff] %v345
    %362 = vst [vmem:[%s3 + $0x38] sm:$0xff] %v346
    %363 = vst [vmem:[%s3 + $0x40] sm:$0xff] %v347
    %364 = vst [vmem:[%s3 + $0x48] sm:$0xff] %v348
    %365 = vst [vmem:[%s3 + $0x50] sm:$0xff] %v349
    %366 = vst [vmem:[%s3 + $0x58] sm:$0xff] %v350
    %367 = vst [vmem:[%s3 + $0x60] sm:$0xff] %v351
    %368 = vst [vmem:[%s3 + $0x68] sm:$0xff] %v352
    %369 = vst [vmem:[%s3 + $0x70] sm:$0xff] %v353
    %370 = vst [vmem:[%s3 + $0x78] sm:$0xff] %v354
  $region21: #{graph_convolution.3} parent=0 // pred_fallthru
    _
  // Predicated region
  $region22: #{graph_convolution.3} parent=0 // pred_check
    _
  $region23: #{graph_convolution.3} parent=0 // pred_check_branch
    %372 = sbr.rel (0) target = $region25
  $region24: #{graph_convolution.3} parent=0 // pred_region
    _
  $region25: #{graph_convolution.3} parent=0 // pred_fallthru
    _
  // Predicated region
  $region26: #{graph_convolution.3} parent=0 // pred_check
    _
  $region27: #{graph_convolution.3} parent=0 // pred_check_branch
    %374 = sbr.rel (0) target = $region29
  $region28: #{graph_convolution.3} parent=0 // pred_region
    _
  $region29: #{graph_convolution.3} parent=0 // pred_fallthru
    _

// kernel: graph_convolution.2
$region0: #{graph_convolution.2}
  #allocation0 [shape = 'u32[]', space=smem, size = 0x4, offset = 0x4, fixed_abs, tag = 'smem constant byte address 0x4 - core index']
  #allocation1 [shape = 'u32[144,128]{1,0:T(1,128)}', space=vmem, size = 0x12000, scoped, tag = 'internal scratch']
  #allocation2 [shape = 'f32[128,128]{1,0:T(8,128)}', space=vmem, size = 0x10000, scoped, tag = 'scratch operand']
  %s0 = inlined_call_operand.vmem [shape: bf16[128,128], index: 0, kind: input, shape index: {}]
  %s1 = inlined_call_operand.vmem [shape: bf16[128,128], index: 1, kind: input, shape index: {}]
  %s2 = inlined_call_operand.vmem [shape: bf16[128,128], index: 2, kind: output, shape index: {}]
  %s3 = sld [smem:[#allocation0]]
  $region26: #{graph_convolution.2} parent=0
    _
  %s5 = ssub.s32 1, %s3
  %s6 = scalar_select 0, %s5, %s3
  // Predicated region
  $region2: #{graph_convolution.2} parent=0 // pred_check
    _
  $region3: #{graph_convolution.2} parent=0 // pred_check_branch
    %8 = sbr.rel (0) target = $region5
  $region4: #{graph_convolution.2} parent=0 // pred_region
    _
  $region5: #{graph_convolution.2} parent=0 // pred_fallthru
    _
  // Predicated region
  $region6: #{graph_convolution.2} parent=0 // pred_check
    _
  $region7: #{graph_convolution.2} parent=0 // pred_check_branch
    %10 = sbr.rel (0) target = $region9
  $region8: #{graph_convolution.2} parent=0 // pred_region
    _
  $region9: #{graph_convolution.2} parent=0 // pred_fallthru
    _
  %p12 = scmp.eq.s32.totalorder 0, 0
  // Predicated region
  $region10: #{graph_convolution.2} parent=0 // pred_check
    %p13 = pneg %p12
  $region11: #{graph_convolution.2} parent=0 // pred_check_branch
    %15 = sbr.rel (%p13) target = $region13
  $region12: #{graph_convolution.2} parent=0 // pred_region
    %16 = vst [vmem:[#allocation2] sm:$0xff] 0.0
    %17 = vst [vmem:[#allocation2 + $0x8] sm:$0xff] 0.0
    %18 = vst [vmem:[#allocation2 + $0x10] sm:$0xff] 0.0
    %19 = vst [vmem:[#allocation2 + $0x18] sm:$0xff] 0.0
    %20 = vst [vmem:[#allocation2 + $0x20] sm:$0xff] 0.0
    %21 = vst [vmem:[#allocation2 + $0x28] sm:$0xff] 0.0
    %22 = vst [vmem:[#allocation2 + $0x30] sm:$0xff] 0.0
    %23 = vst [vmem:[#allocation2 + $0x38] sm:$0xff] 0.0
    %24 = vst [vmem:[#allocation2 + $0x40] sm:$0xff] 0.0
    %25 = vst [vmem:[#allocation2 + $0x48] sm:$0xff] 0.0
    %26 = vst [vmem:[#allocation2 + $0x50] sm:$0xff] 0.0
    %27 = vst [vmem:[#allocation2 + $0x58] sm:$0xff] 0.0
    %28 = vst [vmem:[#allocation2 + $0x60] sm:$0xff] 0.0
    %29 = vst [vmem:[#allocation2 + $0x68] sm:$0xff] 0.0
    %30 = vst [vmem:[#allocation2 + $0x70] sm:$0xff] 0.0
    %31 = vst [vmem:[#allocation2 + $0x78] sm:$0xff] 0.0
  $region13: #{graph_convolution.2} parent=0 // pred_fallthru
    _
  %v32 = vld [vmem:[%s0] sm:$0xf]
  %v33 = vld [vmem:[%s0 + $0x4] sm:$0xf]
  %v34 = vld [vmem:[%s0 + $0x8] sm:$0xf]
  %v35 = vld [vmem:[%s0 + $0xc] sm:$0xf]
  %v36 = vld [vmem:[%s0 + $0x10] sm:$0xf]
  %v37 = vld [vmem:[%s0 + $0x14] sm:$0xf]
  %v38 = vld [vmem:[%s0 + $0x18] sm:$0xf]
  %v39 = vld [vmem:[%s0 + $0x1c] sm:$0xf]
  %v40 = vld [vmem:[%s0 + $0x20] sm:$0xf]
  %v41 = vld [vmem:[%s0 + $0x24] sm:$0xf]
  %v42 = vld [vmem:[%s0 + $0x28] sm:$0xf]
  %v43 = vld [vmem:[%s0 + $0x2c] sm:$0xf]
  %v44 = vld [vmem:[%s0 + $0x30] sm:$0xf]
  %v45 = vld [vmem:[%s0 + $0x34] sm:$0xf]
  %v46 = vld [vmem:[%s0 + $0x38] sm:$0xf]
  %v47 = vld [vmem:[%s0 + $0x3c] sm:$0xf]
  %s48 = smul.u32 0, 128
  %s49 = sshra.s32 %s48, 3
  %s50 = sand.u32 %s48, 7
  %s51 = smul.addr %s49, 4
  %s52 = scalar_lea.vmem %s1, %s51
  %v53 = vld [vmem:[%s52] sm:$0xf]
  %v54 = vld [vmem:[%s52 + $0x4] sm:$0xf]
  %v55 = vld [vmem:[%s52 + $0x8] sm:$0xf]
  %v56 = vld [vmem:[%s52 + $0xc] sm:$0xf]
  %v57 = vld [vmem:[%s52 + $0x10] sm:$0xf]
  %v58 = vld [vmem:[%s52 + $0x14] sm:$0xf]
  %v59 = vld [vmem:[%s52 + $0x18] sm:$0xf]
  %v60 = vld [vmem:[%s52 + $0x1c] sm:$0xf]
  %v61 = vld [vmem:[%s52 + $0x20] sm:$0xf]
  %v62 = vld [vmem:[%s52 + $0x24] sm:$0xf]
  %v63 = vld [vmem:[%s52 + $0x28] sm:$0xf]
  %v64 = vld [vmem:[%s52 + $0x2c] sm:$0xf]
  %v65 = vld [vmem:[%s52 + $0x30] sm:$0xf]
  %v66 = vld [vmem:[%s52 + $0x34] sm:$0xf]
  %v67 = vld [vmem:[%s52 + $0x38] sm:$0xf]
  %v68 = vld [vmem:[%s52 + $0x3c] sm:$0xf]
  %v69 = vld [vmem:[#allocation2] sm:$0xff]
  %v70 = vld [vmem:[#allocation2 + $0x8] sm:$0xff]
  %v71 = vld [vmem:[#allocation2 + $0x10] sm:$0xff]
  %v72 = vld [vmem:[#allocation2 + $0x18] sm:$0xff]
  %v73 = vld [vmem:[#allocation2 + $0x20] sm:$0xff]
  %v74 = vld [vmem:[#allocation2 + $0x28] sm:$0xff]
  %v75 = vld [vmem:[#allocation2 + $0x30] sm:$0xff]
  %v76 = vld [vmem:[#allocation2 + $0x38] sm:$0xff]
  %v77 = vld [vmem:[#allocation2 + $0x40] sm:$0xff]
  %v78 = vld [vmem:[#allocation2 + $0x48] sm:$0xff]
  %v79 = vld [vmem:[#allocation2 + $0x50] sm:$0xff]
  %v80 = vld [vmem:[#allocation2 + $0x58] sm:$0xff]
  %v81 = vld [vmem:[#allocation2 + $0x60] sm:$0xff]
  %v82 = vld [vmem:[#allocation2 + $0x68] sm:$0xff]
  %v83 = vld [vmem:[#allocation2 + $0x70] sm:$0xff]
  %v84 = vld [vmem:[#allocation2 + $0x78] sm:$0xff]
  %v101 = vunpack.c.l.b16 %v32
  %v102 = vunpack.c.l.b16 %v33
  %v103 = vunpack.c.l.b16 %v34
  %v104 = vunpack.c.l.b16 %v35
  %v105 = vunpack.c.l.b16 %v36
  %v106 = vunpack.c.l.b16 %v37
  %v107 = vunpack.c.l.b16 %v38
  %v108 = vunpack.c.l.b16 %v39
  %v109 = vunpack.c.l.b16 %v40
  %v110 = vunpack.c.l.b16 %v41
  %v111 = vunpack.c.l.b16 %v42
  %v112 = vunpack.c.l.b16 %v43
  %v113 = vunpack.c.l.b16 %v44
  %v114 = vunpack.c.l.b16 %v45
  %v115 = vunpack.c.l.b16 %v46
  %v116 = vunpack.c.l.b16 %v47
  %v117 = vpack.c.b16 %v102, %v101
  %v118 = vpack.c.b16 %v104, %v103
  %v119 = vpack.c.b16 %v106, %v105
  %v120 = vpack.c.b16 %v108, %v107
  %v121 = vpack.c.b16 %v110, %v109
  %v122 = vpack.c.b16 %v112, %v111
  %v123 = vpack.c.b16 %v114, %v113
  %v124 = vpack.c.b16 %v116, %v115
  %v149 = vunpack.c.l.b16 %v53
  %v150 = vunpack.c.l.b16 %v54
  %v151 = vunpack.c.l.b16 %v55
  %v152 = vunpack.c.l.b16 %v56
  %v153 = vunpack.c.l.b16 %v57
  %v154 = vunpack.c.l.b16 %v58
  %v155 = vunpack.c.l.b16 %v59
  %v156 = vunpack.c.l.b16 %v60
  %v157 = vunpack.c.l.b16 %v61
  %v158 = vunpack.c.l.b16 %v62
  %v159 = vunpack.c.l.b16 %v63
  %v160 = vunpack.c.l.b16 %v64
  %v161 = vunpack.c.l.b16 %v65
  %v162 = vunpack.c.l.b16 %v66
  %v163 = vunpack.c.l.b16 %v67
  %v164 = vunpack.c.l.b16 %v68
  %v165 = vpack.c.b16 %v150, %v149
  %v166 = vpack.c.b16 %v152, %v151
  %v167 = vpack.c.b16 %v154, %v153
  %v168 = vpack.c.b16 %v156, %v155
  %v169 = vpack.c.b16 %v158, %v157
  %v170 = vpack.c.b16 %v160, %v159
  %v171 = vpack.c.b16 %v162, %v161
  %v172 = vpack.c.b16 %v164, %v163
  %181 = vmatprep.subr.bf16.mxu0 0
  %182 = vmatpush1.bf16.msra.mxu0 %v165
  %183 = vmatprep.subr.bf16.mxu0 0
  %184 = vmatpush1.bf16.msra.mxu0 %v166
  %185 = vmatprep.subr.bf16.mxu0 0
  %186 = vmatpush1.bf16.msra.mxu0 %v167
  %187 = vmatprep.subr.bf16.mxu0 0
  %188 = vmatpush1.bf16.msra.mxu0 %v168
  %189 = vmatprep.subr.bf16.mxu0 0
  %190 = vmatpush1.bf16.msra.mxu0 %v169
  %191 = vmatprep.subr.bf16.mxu0 0
  %192 = vmatpush1.bf16.msra.mxu0 %v170
  %193 = vmatprep.subr.bf16.mxu0 0
  %194 = vmatpush1.bf16.msra.mxu0 %v171
  %195 = vmatprep.subr.bf16.mxu0 0
  %196 = vmatpush1.bf16.msra.mxu0 %v172
  %197 = vmatprep.subr.bf16.mxu0 0
  %198 = vmatpush1.bf16.msra.mxu0 0
  %199 = vmatprep.subr.bf16.mxu0 0
  %200 = vmatpush1.bf16.msra.mxu0 0
  %201 = vmatprep.subr.bf16.mxu0 0
  %202 = vmatpush1.bf16.msra.mxu0 0
  %203 = vmatprep.subr.bf16.mxu0 0
  %204 = vmatpush1.bf16.msra.mxu0 0
  %205 = vmatprep.subr.bf16.mxu0 0
  %206 = vmatpush1.bf16.msra.mxu0 0
  %207 = vmatprep.subr.bf16.mxu0 0
  %208 = vmatpush1.bf16.msra.mxu0 0
  %209 = vmatprep.subr.bf16.mxu0 0
  %210 = vmatpush1.bf16.msra.mxu0 0
  %211 = vmatprep.subr.bf16.mxu0 0
  %212 = vmatpush1.bf16.msra.mxu0 0
  %213 = vmatprep.mubr.bf16.mxu0 0
  %214 = vmatmul.mubr.bf16.gmra.mrb[0].mxu0 %v117
  %v215 = vpop.f32.mrb[0].mxu0
  %v216 = vadd.f32 0.0, %v215
  %v217 = vpop.f32.mrb[0].mxu0
  %v218 = vpop.f32.mrb[0].mxu0
  %v219 = vadd.f32 0.0, %v218
  %v220 = vpop.f32.mrb[0].mxu0
  %221 = vmatprep.mubr.bf16.mxu0 0
  %222 = vmatmul.mubr.bf16.gmra.mrb[0].mxu0 %v118
  %v223 = vpop.f32.mrb[0].mxu0
  %v224 = vadd.f32 0.0, %v223
  %v225 = vpop.f32.mrb[0].mxu0
  %v226 = vpop.f32.mrb[0].mxu0
  %v227 = vadd.f32 0.0, %v226
  %v228 = vpop.f32.mrb[0].mxu0
  %229 = vmatprep.mubr.bf16.mxu0 0
  %230 = vmatmul.mubr.bf16.gmra.mrb[0].mxu0 %v119
  %v231 = vpop.f32.mrb[0].mxu0
  %v232 = vadd.f32 0.0, %v231
  %v233 = vpop.f32.mrb[0].mxu0
  %v234 = vpop.f32.mrb[0].mxu0
  %v235 = vadd.f32 0.0, %v234
  %v236 = vpop.f32.mrb[0].mxu0
  %237 = vmatprep.mubr.bf16.mxu0 0
  %238 = vmatmul.mubr.bf16.gmra.mrb[0].mxu0 %v120
  %v239 = vpop.f32.mrb[0].mxu0
  %v240 = vadd.f32 0.0, %v239
  %v241 = vpop.f32.mrb[0].mxu0
  %v242 = vpop.f32.mrb[0].mxu0
  %v243 = vadd.f32 0.0, %v242
  %v244 = vpop.f32.mrb[0].mxu0
  %245 = vmatprep.mubr.bf16.mxu0 0
  %246 = vmatmul.mubr.bf16.gmra.mrb[0].mxu0 %v121
  %v247 = vpop.f32.mrb[0].mxu0
  %v248 = vadd.f32 0.0, %v247
  %v249 = vpop.f32.mrb[0].mxu0
  %v250 = vpop.f32.mrb[0].mxu0
  %v251 = vadd.f32 0.0, %v250
  %v252 = vpop.f32.mrb[0].mxu0
  %253 = vmatprep.mubr.bf16.mxu0 0
  %254 = vmatmul.mubr.bf16.gmra.mrb[0].mxu0 %v122
  %v255 = vpop.f32.mrb[0].mxu0
  %v256 = vadd.f32 0.0, %v255
  %v257 = vpop.f32.mrb[0].mxu0
  %v258 = vpop.f32.mrb[0].mxu0
  %v259 = vadd.f32 0.0, %v258
  %v260 = vpop.f32.mrb[0].mxu0
  %261 = vmatprep.mubr.bf16.mxu0 0
  %262 = vmatmul.mubr.bf16.gmra.mrb[0].mxu0 %v123
  %v263 = vpop.f32.mrb[0].mxu0
  %v264 = vadd.f32 0.0, %v263
  %v265 = vpop.f32.mrb[0].mxu0
  %v266 = vpop.f32.mrb[0].mxu0
  %v267 = vadd.f32 0.0, %v266
  %v268 = vpop.f32.mrb[0].mxu0
  %269 = vmatprep.mubr.bf16.mxu0 0
  %270 = vmatmul.mubr.bf16.gmra.mrb[0].mxu0 %v124
  %v271 = vpop.f32.mrb[0].mxu0
  %v272 = vadd.f32 0.0, %v271
  %v273 = vpop.f32.mrb[0].mxu0
  %v274 = vpop.f32.mrb[0].mxu0
  %v275 = vadd.f32 0.0, %v274
  %v276 = vpop.f32.mrb[0].mxu0
  %277 = vdwg.mxu0
  %v278 = vadd.f32 %v69, %v216
  %v279 = vadd.f32 %v70, %v219
  %v280 = vadd.f32 %v71, %v224
  %v281 = vadd.f32 %v72, %v227
  %v282 = vadd.f32 %v73, %v232
  %v283 = vadd.f32 %v74, %v235
  %v284 = vadd.f32 %v75, %v240
  %v285 = vadd.f32 %v76, %v243
  %v286 = vadd.f32 %v77, %v248
  %v287 = vadd.f32 %v78, %v251
  %v288 = vadd.f32 %v79, %v256
  %v289 = vadd.f32 %v80, %v259
  %v290 = vadd.f32 %v81, %v264
  %v291 = vadd.f32 %v82, %v267
  %v292 = vadd.f32 %v83, %v272
  %v293 = vadd.f32 %v84, %v275
  %294 = vst [vmem:[#allocation2] sm:$0xff] %v278
  %295 = vst [vmem:[#allocation2 + $0x8] sm:$0xff] %v279
  %296 = vst [vmem:[#allocation2 + $0x10] sm:$0xff] %v280
  %297 = vst [vmem:[#allocation2 + $0x18] sm:$0xff] %v281
  %298 = vst [vmem:[#allocation2 + $0x20] sm:$0xff] %v282
  %299 = vst [vmem:[#allocation2 + $0x28] sm:$0xff] %v283
  %300 = vst [vmem:[#allocation2 + $0x30] sm:$0xff] %v284
  %301 = vst [vmem:[#allocation2 + $0x38] sm:$0xff] %v285
  %302 = vst [vmem:[#allocation2 + $0x40] sm:$0xff] %v286
  %303 = vst [vmem:[#allocation2 + $0x48] sm:$0xff] %v287
  %304 = vst [vmem:[#allocation2 + $0x50] sm:$0xff] %v288
  %305 = vst [vmem:[#allocation2 + $0x58] sm:$0xff] %v289
  %306 = vst [vmem:[#allocation2 + $0x60] sm:$0xff] %v290
  %307 = vst [vmem:[#allocation2 + $0x68] sm:$0xff] %v291
  %308 = vst [vmem:[#allocation2 + $0x70] sm:$0xff] %v292
  %309 = vst [vmem:[#allocation2 + $0x78] sm:$0xff] %v293
  // Predicated region
  $region14: #{graph_convolution.2} parent=0 // pred_check
    %p310 = pneg %p12
  $region15: #{graph_convolution.2} parent=0 // pred_check_branch
    %312 = sbr.rel (%p310) target = $region17
  $region16: #{graph_convolution.2} parent=0 // pred_region
    %v313 = vld [vmem:[#allocation2] sm:$0xff]
    %v314 = vld [vmem:[#allocation2 + $0x8] sm:$0xff]
    %v315 = vld [vmem:[#allocation2 + $0x10] sm:$0xff]
    %v316 = vld [vmem:[#allocation2 + $0x18] sm:$0xff]
    %v317 = vld [vmem:[#allocation2 + $0x20] sm:$0xff]
    %v318 = vld [vmem:[#allocation2 + $0x28] sm:$0xff]
    %v319 = vld [vmem:[#allocation2 + $0x30] sm:$0xff]
    %v320 = vld [vmem:[#allocation2 + $0x38] sm:$0xff]
    %v321 = vld [vmem:[#allocation2 + $0x40] sm:$0xff]
    %v322 = vld [vmem:[#allocation2 + $0x48] sm:$0xff]
    %v323 = vld [vmem:[#allocation2 + $0x50] sm:$0xff]
    %v324 = vld [vmem:[#allocation2 + $0x58] sm:$0xff]
    %v325 = vld [vmem:[#allocation2 + $0x60] sm:$0xff]
    %v326 = vld [vmem:[#allocation2 + $0x68] sm:$0xff]
    %v327 = vld [vmem:[#allocation2 + $0x70] sm:$0xff]
    %v328 = vld [vmem:[#allocation2 + $0x78] sm:$0xff]
    %v329 = vpack.c.bf16 %v314, %v313
    %v330 = vpack.c.bf16 %v316, %v315
    %v331 = vpack.c.bf16 %v318, %v317
    %v332 = vpack.c.bf16 %v320, %v319
    %v333 = vpack.c.bf16 %v322, %v321
    %v334 = vpack.c.bf16 %v324, %v323
    %v335 = vpack.c.bf16 %v326, %v325
    %v336 = vpack.c.bf16 %v328, %v327
    %v345 = vunpack.c.l.b16 %v329
    %v346 = vunpack.c.h.b16 %v329
    %v347 = vunpack.c.l.b16 %v330
    %v348 = vunpack.c.h.b16 %v330
    %v349 = vunpack.c.l.b16 %v331
    %v350 = vunpack.c.h.b16 %v331
    %v351 = vunpack.c.l.b16 %v332
    %v352 = vunpack.c.h.b16 %v332
    %v353 = vunpack.c.l.b16 %v333
    %v354 = vunpack.c.h.b16 %v333
    %v355 = vunpack.c.l.b16 %v334
    %v356 = vunpack.c.h.b16 %v334
    %v357 = vunpack.c.l.b16 %v335
    %v358 = vunpack.c.h.b16 %v335
    %v359 = vunpack.c.l.b16 %v336
    %v360 = vunpack.c.h.b16 %v336
    %v361 = vpack.c.b16 %v345, %v345
    %v362 = vpack.c.b16 %v346, %v346
    %v363 = vpack.c.b16 %v347, %v347
    %v364 = vpack.c.b16 %v348, %v348
    %v365 = vpack.c.b16 %v349, %v349
    %v366 = vpack.c.b16 %v350, %v350
    %v367 = vpack.c.b16 %v351, %v351
    %v368 = vpack.c.b16 %v352, %v352
    %v369 = vpack.c.b16 %v353, %v353
    %v370 = vpack.c.b16 %v354, %v354
    %v371 = vpack.c.b16 %v355, %v355
    %v372 = vpack.c.b16 %v356, %v356
    %v373 = vpack.c.b16 %v357, %v357
    %v374 = vpack.c.b16 %v358, %v358
    %v375 = vpack.c.b16 %v359, %v359
    %v376 = vpack.c.b16 %v360, %v360
    %393 = vst [vmem:[%s2] sm:$0xf] %v361
    %394 = vst [vmem:[%s2 + $0x4] sm:$0xf] %v362
    %395 = vst [vmem:[%s2 + $0x8] sm:$0xf] %v363
    %396 = vst [vmem:[%s2 + $0xc] sm:$0xf] %v364
    %397 = vst [vmem:[%s2 + $0x10] sm:$0xf] %v365
    %398 = vst [vmem:[%s2 + $0x14] sm:$0xf] %v366
    %399 = vst [vmem:[%s2 + $0x18] sm:$0xf] %v367
    %400 = vst [vmem:[%s2 + $0x1c] sm:$0xf] %v368
    %401 = vst [vmem:[%s2 + $0x20] sm:$0xf] %v369
    %402 = vst [vmem:[%s2 + $0x24] sm:$0xf] %v370
    %403 = vst [vmem:[%s2 + $0x28] sm:$0xf] %v371
    %404 = vst [vmem:[%s2 + $0x2c] sm:$0xf] %v372
    %405 = vst [vmem:[%s2 + $0x30] sm:$0xf] %v373
    %406 = vst [vmem:[%s2 + $0x34] sm:$0xf] %v374
    %407 = vst [vmem:[%s2 + $0x38] sm:$0xf] %v375
    %408 = vst [vmem:[%s2 + $0x3c] sm:$0xf] %v376
  $region17: #{graph_convolution.2} parent=0 // pred_fallthru
    _
  // Predicated region
  $region18: #{graph_convolution.2} parent=0 // pred_check
    _
  $region19: #{graph_convolution.2} parent=0 // pred_check_branch
    %410 = sbr.rel (0) target = $region21
  $region20: #{graph_convolution.2} parent=0 // pred_region
    _
  $region21: #{graph_convolution.2} parent=0 // pred_fallthru
    _
  // Predicated region
  $region22: #{graph_convolution.2} parent=0 // pred_check
    _
  $region23: #{graph_convolution.2} parent=0 // pred_check_branch
    %412 = sbr.rel (0) target = $region25
  $region24: #{graph_convolution.2} parent=0 // pred_region
    _
  $region25: #{graph_convolution.2} parent=0 // pred_fallthru
    _

</llo_original>
